<compile_context>
chip_gen: v7x
topology: tpu7x:2x2x1
jax: 0.10.0
libtpu: 0.0.40
codegen_flags: <defaults>
</compile_context>

<pallas_src>
import jax
import jax.numpy as jnp
from jax.experimental import pallas as pl
from jax.experimental.pallas import tpu as pltpu

LANES = 128
TARGET_BLOCK_BYTES = 2 * 1024 * 1024  # per-block VMEM footprint target


def _tanh_kernel(x_ref, o_ref):
    # Whole tile resident in VMEM; tanh lowers to the EUP (free bundle slot),
    # HBM bandwidth is the only real cost.
    o_ref[...] = jnp.tanh(x_ref[...])


def _round_up(x: int, m: int) -> int:
    return ((x + m - 1) // m) * m


def _sublane_multiple(dtype) -> int:
    # f32 -> 8, bf16/f16 -> 16, int8/fp8 -> 32 (sublane packing).
    itemsize = jnp.dtype(dtype).itemsize
    return max(8, 32 // max(itemsize, 1))


def _choose_rows_per_block(rows_padded: int, sub: int, itemsize: int) -> int:
    """Pick the block row count (multiple of `sub`)."""
    bytes_per_row = LANES * itemsize
    total_bytes = rows_padded * bytes_per_row

    # Rows giving ~TARGET_BLOCK_BYTES per block.
    tgt_rows = max(sub, (TARGET_BLOCK_BYTES // bytes_per_row) // sub * sub)
    nblocks = pl.cdiv(rows_padded, tgt_rows)

    # Guarantee enough blocks for pipelining + v7x megacore sharding once the
    # input is big enough to amortize the ~0.35 us per-step overhead.
    if total_bytes >= 4 * 1024 * 1024:
        nblocks = max(nblocks, 4)
    elif total_bytes >= 1 * 1024 * 1024:
        nblocks = max(nblocks, 2)
    else:
        nblocks = 1

    tr = _round_up(pl.cdiv(rows_padded, nblocks), sub)
    return min(tr, rows_padded)


def tanh_pallas(x: jax.Array) -> jax.Array:
    """Apply tanh elementwise via a Pallas TPU kernel. Same shape/dtype as input."""
    orig_shape = x.shape
    orig_dtype = x.dtype
    n = x.size
    if n == 0:
        return x

    itemsize = jnp.dtype(orig_dtype).itemsize
    sub = _sublane_multiple(orig_dtype)

    # Flatten to a lane-dense 2-D slab (rows, 128); pad rows only up to the
    # next sublane multiple (minimal), never up to a full block.
    flat = x.reshape(-1)
    rows = pl.cdiv(n, LANES)
    rows_padded = _round_up(rows, sub)
    pad = rows_padded * LANES - n
    if pad:
        # Rare path; pad is < sub*128 elements. tanh(0) = 0 so padding is benign.
        flat = jnp.pad(flat, (0, pad))
    slab = flat.reshape(rows_padded, LANES)

    tr = _choose_rows_per_block(rows_padded, sub, itemsize)
    grid = (pl.cdiv(rows_padded, tr),)

    out = pl.pallas_call(
        _tanh_kernel,
        out_shape=jax.ShapeDtypeStruct((rows_padded, LANES), orig_dtype),
        grid=grid,
        in_specs=[pl.BlockSpec((tr, LANES), lambda i: (i, 0))],
        out_specs=pl.BlockSpec((tr, LANES), lambda i: (i, 0)),
        compiler_params=pltpu.CompilerParams(
            dimension_semantics=("parallel",),
            # 2 arrays x 2 buffers x ~2 MiB blocks (+ headroom); safe on every
            # generation, including v7x's 64 MiB physical VMEM.
            vmem_limit_bytes=32 * 1024 * 1024,
        ),
    )(slab)

    if pad:
        out = out.reshape(-1)[:n]
    return out.reshape(orig_shape)


if __name__ == "__main__":
    key = jax.random.PRNGKey(0)
    # Small shape consistent with an "any shape" elementwise op.
    x = jax.random.normal(key, (2, 4, 16, 16), dtype=jnp.float32)

    y = tanh_pallas(x)
    jax.block_until_ready(y)

    # Correctness check against plain JAX reference.
    y_ref = jnp.tanh(x)
    assert y.shape == x.shape and y.dtype == x.dtype
    assert jnp.allclose(y, y_ref, atol=1e-6, rtol=1e-6)

    print("KERNEL_OK")
</pallas_src>

<mosaic_0001>
module attributes {stable_mosaic.version = 11 : i64} {
  func.func @_tanh_kernel(%arg0: i32, %arg1: memref<16x128xf32, #tpu.memory_space<vmem>>, %arg2: memref<16x128xf32, #tpu.memory_space<vmem>>) attributes {dimension_semantics = [#tpu.dimension_semantics<parallel>], iteration_bounds = array<i64: 1>, scalar_prefetch = 0 : i64, scratch_operands = 0 : i64, tpu.core_type = #tpu.core_type<tc>, window_params = [{transform_indices = @transform_0, window_bounds = array<i64: 16, 128>}, {transform_indices = @transform_1, window_bounds = array<i64: 16, 128>}]} {
    %c0 = arith.constant 0 : index
    %c0_0 = arith.constant 0 : index
    %0 = vector.load %arg1[%c0, %c0_0] : memref<16x128xf32, #tpu.memory_space<vmem>>, vector<16x128xf32>
    %1 = math.tanh %0 : vector<16x128xf32>
    %c0_1 = arith.constant 0 : index
    %c0_2 = arith.constant 0 : index
    %2 = vector.load %arg2[%c0_1, %c0_2] : memref<16x128xf32, #tpu.memory_space<vmem>>, vector<16x128xf32>
    tpu.vector_store %arg2[%c0_1, %c0_2], %1 {strides = array<i32>} : memref<16x128xf32, #tpu.memory_space<vmem>>, vector<16x128xf32>,
    return
  }
  func.func @transform_0(%arg0: i32) -> (i32, i32) {
    %c0_i32 = arith.constant 0 : i32
    %c0_i32_0 = arith.constant 0 : i32
    return %arg0, %c0_i32 : i32, i32
  }
  func.func @transform_1(%arg0: i32) -> (i32, i32) {
    %c0_i32 = arith.constant 0 : i32
    %c0_i32_0 = arith.constant 0 : i32
    return %arg0, %c0_i32 : i32, i32
  }
}

</mosaic_0001>

<llo_original>
// kernel: tpu_custom_call.1
$region0: #{tpu_custom_call.1}
  #allocation0 [shape = 'u32[]', space=smem, size = 0x4, offset = 0x4, fixed_abs, tag = 'smem constant byte address 0x4 - core index']
  #allocation1 [shape = 'u32[144,128]{1,0:T(1,128)}', space=vmem, size = 0x12000, scoped, tag = 'internal scratch']
  %s0 = inlined_call_operand.hbm [shape: f32[16,128], index: 0, kind: input, shape index: {}]
  %s1 = inlined_call_operand.hbm [shape: f32[16,128], index: 1, kind: output, shape index: {}]
  %s2 = sld [smem:[#allocation0]]
  $region18: #{tpu_custom_call.1} parent=0
    _
  %s4 = ssub.s32 1, %s2
  %s5 = scalar_select 0, %s4, %s2
  $region1: #{tpu_custom_call.1} parent=0
    #allocation2 [shape = 'u8[8192]{0}', space=vmem, size = 0x2000, scoped, tag = 'input window, operand 0, single buffered']
    #allocation3 [shape = 's32[1]{0}', space=sflag, size = 0x4, scoped, tag = 'scoped memory for tpu_custom_call.1']
    #allocation4 [shape = 's32[1]{0}', space=sflag, size = 0x4, scoped, tag = 'scoped memory for tpu_custom_call.1']
    #allocation5 [shape = 'u8[8192]{0}', space=vmem, size = 0x2000, scoped, tag = 'output window, operand 0, single buffered']
    %6 = vsyncpa [#allocation3], 0
    %7 = vsyncpa [#allocation4], 0
    // Predicated region
    $region2: #{tpu_custom_call.1} parent=1 // pred_check
      _
    $region3: #{tpu_custom_call.1} parent=1 // pred_check_branch
      %9 = sbr.rel (0) target = $region5
    $region4: #{tpu_custom_call.1} parent=1 // pred_region
      %s11 = ssub.s32 256, 256
      %12 = vsyncadd [#allocation3], %s11
      %s13 = sshll.u32 [#allocation2], 4
      %s14 = int_to_ptr.vmem [resolvable:$true] %s13
      %19 = dma.hbm_to_vmem [thread:$0]  %s0, 256, %s14, [#allocation3], 128, 128, 8
    $region5: #{tpu_custom_call.1} parent=1 // pred_fallthru
      _
    // Predicated region
    $region6: #{tpu_custom_call.1} parent=1 // pred_check
      _
    $region7: #{tpu_custom_call.1} parent=1 // pred_check_branch
      %21 = sbr.rel (0) target = $region9
    $region8: #{tpu_custom_call.1} parent=1 // pred_region
      %22 = dma.done [#allocation3], 256
    $region9: #{tpu_custom_call.1} parent=1 // pred_fallthru
      _
    %v23 = vld [vmem:[#allocation2] sm:$0xff]
    %v24 = vld [vmem:[#allocation2 + $0x8] sm:$0xff]
    %v25 = vtanh.pop %v23
    %v26 = vtanh.pop %v24
    %27 = vst [vmem:[#allocation5] sm:$0xff] %v25
    %28 = vst [vmem:[#allocation5 + $0x8] sm:$0xff] %v26
    // Predicated region
    $region10: #{tpu_custom_call.1} parent=1 // pred_check
      _
    $region11: #{tpu_custom_call.1} parent=1 // pred_check_branch
      %30 = sbr.rel (0) target = $region13
    $region12: #{tpu_custom_call.1} parent=1 // pred_region
      %s32 = ssub.s32 256, 256
      %33 = vsyncadd [#allocation4], %s32
      %s34 = sshll.u32 [#allocation5], 4
      %s35 = int_to_ptr.vmem [resolvable:$true] %s34
      %40 = dma.vmem_to_hbm [thread:$0]  %s35, 256, %s1, [#allocation4], 128, 128, 8
    $region13: #{tpu_custom_call.1} parent=1 // pred_fallthru
      _
    // Predicated region
    $region14: #{tpu_custom_call.1} parent=1 // pred_check
      _
    $region15: #{tpu_custom_call.1} parent=1 // pred_check_branch
      %42 = sbr.rel (0) target = $region17
    $region16: #{tpu_custom_call.1} parent=1 // pred_region
      %43 = dma.done [#allocation4], 256
    $region17: #{tpu_custom_call.1} parent=1 // pred_fallthru
      _
    %44 = vsyncpa [#allocation3], 1
    %45 = vsyncpa [#allocation4], 1

</llo_original>
